<compile_context>
chip_gen: v5e
topology: v5e:2x2
jax: 0.10.0
libtpu: 0.0.40
codegen_flags: <defaults>
</compile_context>

<pallas_src>
import math

import jax
import jax.numpy as jnp
from jax import lax
from jax.experimental import pallas as pl
from jax.experimental.pallas import tpu as pltpu

_SQRT_HALF = 0.7071067811865476


def _erf_f32(x):
    # Abramowitz & Stegun 7.1.26 rational approximation, |err| <= 1.5e-7.
    # TODO(synk): swap to lax.erf if/when Mosaic guarantees an EUP lowering;
    # the polynomial is kept because it is known to compile cleanly.
    p = 0.3275911
    a1, a2, a3, a4, a5 = (0.254829592, -0.284496736, 1.421413741,
                          -1.453152027, 1.061405429)
    s = jnp.where(x >= 0.0, 1.0, -1.0)
    z = jnp.abs(x)
    t = pl.reciprocal(1.0 + p * z, approx=False)
    poly = ((((a5 * t + a4) * t + a3) * t + a2) * t + a1) * t
    return s * (1.0 - poly * jnp.exp(-z * z))


def _gelu_exact(x):
    # torch.nn.GELU() default = exact (erf-based) GELU.
    return 0.5 * x * (1.0 + _erf_f32(x * _SQRT_HALF))


def fuse_model_2_kernel(t_ref, e_ref,
                        wq_ref, bq_ref,          # scale-folded query proj
                        wkv_ref,                 # fused [Wk | Wv@Wo], NO bias
                        bvo_ref,                 # (bv@Wo + bo), added post-attn
                        w1_ref, b1_ref, w2_ref, b2_ref,
                        pred_ref, logits_ref):
    t = t_ref[...]                               # (N, H)  query source
    e = e_ref[...]                               # (N, H)  key/value source
    h_dim = t.shape[-1]

    # --- nn.MultiheadAttention(embed_dim=H, num_heads=1), eval mode ----------
    # q already carries the 1/sqrt(H) softmax scale (folded into Wq, bq).
    q = jnp.dot(t, wq_ref[...], preferred_element_type=jnp.float32) + bq_ref[...]

    # Single fused (bias-free) projection for K and (V folded with out_proj).
    # bk is exactly cancelled by softmax's per-row shift invariance; the folded
    # V/out bias is applied after the attention matmul (softmax rows sum to 1).
    kv = jnp.dot(e, wkv_ref[...], preferred_element_type=jnp.float32)
    k = kv[:, :h_dim]                            # (N, H) = e @ Wk
    vw = kv[:, h_dim:]                           # (N, H) = e @ (Wv @ Wo)

    # scores = q @ k^T without materializing the transpose.
    scores = lax.dot_general(q, k,
                             dimension_numbers=(((1,), (1,)), ((), ())),
                             preferred_element_type=jnp.float32)        # (N, N)
    m = jnp.max(scores, axis=-1, keepdims=True)
    p = jnp.exp(scores - m)
    attn = p * pl.reciprocal(jnp.sum(p, axis=-1, keepdims=True), approx=False)

    # attn @ vw + (bv@Wo + bo)  ==  ((attn @ v) @ Wo + bo) with v = e@Wv + bv.
    fuseweights = (jnp.dot(attn, vw, preferred_element_type=jnp.float32)
                   + bvo_ref[...])                                       # (N, H)

    # --- fusefeature = tensors * fuseweights ----------------------------------
    fusefeature = t * fuseweights

    # --- classifier: Linear -> GELU -> (Dropout = id) -> Linear ---------------
    h = (jnp.dot(fusefeature, w1_ref[...], preferred_element_type=jnp.float32)
         + b1_ref[...])
    h = _gelu_exact(h)
    logits = (jnp.dot(h, w2_ref[...], preferred_element_type=jnp.float32)
              + b2_ref[...])                                             # (N, 2)
    logits_ref[...] = logits

    # torch.argmax over the 2 classes; ties -> index 0 (strict `>`).
    pred_ref[...] = (logits[:, 1:2] > logits[:, 0:1]).astype(jnp.int32)


def fuse_model_2_forward(tensors, emrs, packed_params):
    n, h = tensors.shape
    vmem = pl.BlockSpec(memory_space=pltpu.MemorySpace.VMEM)

    flops = 2 * n * h * (4 * h + 2 * n + 2) + 8 * n * h + 4 * n * n
    transcendentals = n * n + n + 2 * n * h
    bytes_accessed = 4 * (2 * n * h            # tensors, emrs
                          + h * h + h          # wq, bq
                          + 2 * h * h + h      # wkv, bvo
                          + h * h + h          # w1, b1
                          + 2 * h + 2          # w2, b2
                          + 2 * n + n)         # logits, pred

    pred, logits = pl.pallas_call(
        fuse_model_2_kernel,
        out_shape=(jax.ShapeDtypeStruct((n, 1), jnp.int32),
                   jax.ShapeDtypeStruct((n, 2), jnp.float32)),
        in_specs=[vmem] * (2 + len(packed_params)),
        out_specs=(vmem, vmem),
        cost_estimate=pl.CostEstimate(flops=flops,
                                      transcendentals=transcendentals,
                                      bytes_accessed=bytes_accessed),
    )(tensors, emrs, *packed_params)
    return pred[:, 0], logits


def init_params(key, hidden_size):
    """Deterministic synthetic parameters with PyTorch-native shapes."""
    h = hidden_size
    keys = jax.random.split(key, 6)
    std = 0.05

    # nn.MultiheadAttention: in_proj_weight (3H, H), in_proj_bias (3H,),
    # out_proj.weight (H, H), out_proj.bias (H,)
    in_proj_w = jax.random.normal(keys[0], (3 * h, h), jnp.float32) * std
    in_proj_b = jax.random.normal(keys[1], (3 * h,), jnp.float32) * std
    out_proj_w = jax.random.normal(keys[2], (h, h), jnp.float32) * std
    out_proj_b = jnp.zeros((h,), jnp.float32)

    # TODO(synk): the reference __init__ declares nn.Linear(hidden_size * 2,
    # hidden_size), but forward feeds an H-dim feature (tensors * fuseweights),
    # which would crash in PyTorch.  The first classifier Linear is therefore
    # built with in_features = hidden_size so the forward math (the spec we
    # reproduce exactly) is runnable.
    w1 = jax.random.normal(keys[3], (h, h), jnp.float32) * std   # torch: (out, in)
    b1 = jax.random.normal(keys[4], (h,), jnp.float32) * std
    w2 = jax.random.normal(keys[5], (2, h), jnp.float32) * std
    b2 = jnp.zeros((2,), jnp.float32)

    return (in_proj_w, in_proj_b, out_proj_w, out_proj_b, w1, b1, w2, b2)


def pack_params(torch_params, hidden_size):
    """Host-side packing: (in, out) layout + algebraic folds for the kernel."""
    h = hidden_size
    in_proj_w, in_proj_b, out_proj_w, out_proj_b, w1, b1, w2, b2 = torch_params

    wq_io = in_proj_w[0 * h:1 * h].T             # (H, H) in->out
    wk_io = in_proj_w[1 * h:2 * h].T
    wv_io = in_proj_w[2 * h:3 * h].T
    bq = in_proj_b[0 * h:1 * h]
    bv = in_proj_b[2 * h:3 * h]
    # bk = in_proj_b[h:2h] is exactly cancelled by softmax shift invariance.
    wo_io = out_proj_w.T                         # (H, H) in->out
    bo = out_proj_b

    # Fold 1/sqrt(H) softmax scale into the query projection.
    scale = 1.0 / math.sqrt(h)
    wq_s = wq_io * scale
    bq_s = (bq * scale).reshape(1, h)

    # Fold out_proj into V (exact: softmax rows sum to 1), then fuse K|V'.
    wv_folded = wv_io @ wo_io                    # (H, H)
    wkv = jnp.concatenate([wk_io, wv_folded], axis=1)          # (H, 2H), no bias
    bvo = (bv @ wo_io + bo).reshape(1, h)        # applied after attn @ vw

    w1_t = w1.T
    b1_2d = b1.reshape(1, h)
    w2_t = w2.T
    b2_2d = b2.reshape(1, 2)
    return (wq_s, bq_s, wkv, bvo, w1_t, b1_2d, w2_t, b2_2d)


def reference_forward(tensors, emrs, torch_params, hidden_size):
    """Pure-JAX reference replicating the un-fused PyTorch forward (eval)."""
    h = hidden_size
    in_proj_w, in_proj_b, out_proj_w, out_proj_b, w1, b1, w2, b2 = torch_params
    wq, wk, wv = in_proj_w[:h], in_proj_w[h:2 * h], in_proj_w[2 * h:]
    bq, bk, bv = in_proj_b[:h], in_proj_b[h:2 * h], in_proj_b[2 * h:]

    q = tensors @ wq.T + bq
    k = emrs @ wk.T + bk
    v = emrs @ wv.T + bv
    scores = (q @ k.T) * (1.0 / math.sqrt(h))
    attn = jax.nn.softmax(scores, axis=-1)
    fuseweights = (attn @ v) @ out_proj_w.T + out_proj_b
    fusefeature = tensors * fuseweights
    hid = jax.nn.gelu(fusefeature @ w1.T + b1, approximate=False)
    logits = hid @ w2.T + b2
    pred = jnp.argmax(logits, axis=1).astype(jnp.int32)
    return pred, logits


if __name__ == "__main__":
    N, H = 8, 32   # N samples (= attention sequence length), hidden_size = 32
    key = jax.random.PRNGKey(0)
    k_t, k_e, k_p = jax.random.split(key, 3)

    tensors = jax.random.normal(k_t, (N, H), jnp.float32)
    emrs = jax.random.normal(k_e, (N, H), jnp.float32)

    torch_params = init_params(k_p, H)
    packed = pack_params(torch_params, H)

    pred, logits = fuse_model_2_forward(tensors, emrs, packed)
    pred = jax.block_until_ready(pred)
    logits = jax.block_until_ready(logits)

    ref_pred, ref_logits = reference_forward(tensors, emrs, torch_params, H)
    assert jnp.allclose(logits, ref_logits, atol=1e-4, rtol=1e-4), "logits mismatch"
    assert jnp.array_equal(pred.astype(jnp.int32), ref_pred), "pred_labels mismatch"

    print("KERNEL_OK")
</pallas_src>

<mosaic_0001>
module attributes {stable_mosaic.version = 11 : i64} {
  func.func @fuse_model_2_kernel(%arg0: memref<8x32xf32, #tpu.memory_space<vmem>>, %arg1: memref<8x32xf32, #tpu.memory_space<vmem>>, %arg2: memref<32x32xf32, #tpu.memory_space<vmem>>, %arg3: memref<1x32xf32, #tpu.memory_space<vmem>>, %arg4: memref<32x64xf32, #tpu.memory_space<vmem>>, %arg5: memref<1x32xf32, #tpu.memory_space<vmem>>, %arg6: memref<32x32xf32, #tpu.memory_space<vmem>>, %arg7: memref<1x32xf32, #tpu.memory_space<vmem>>, %arg8: memref<32x2xf32, #tpu.memory_space<vmem>>, %arg9: memref<1x2xf32, #tpu.memory_space<vmem>>, %arg10: memref<8x1xi32, #tpu.memory_space<vmem>>, %arg11: memref<8x2xf32, #tpu.memory_space<vmem>>) attributes {dimension_semantics = [], scalar_prefetch = 0 : i64, scratch_operands = 0 : i64, tpu.core_type = #tpu.core_type<tc>} {
    %c0 = arith.constant 0 : index
    %c0_0 = arith.constant 0 : index
    %0 = vector.load %arg0[%c0, %c0_0] : memref<8x32xf32, #tpu.memory_space<vmem>>, vector<8x32xf32>
    %c0_1 = arith.constant 0 : index
    %c0_2 = arith.constant 0 : index
    %1 = vector.load %arg1[%c0_1, %c0_2] : memref<8x32xf32, #tpu.memory_space<vmem>>, vector<8x32xf32>
    %c0_3 = arith.constant 0 : index
    %c0_4 = arith.constant 0 : index
    %2 = vector.load %arg2[%c0_3, %c0_4] : memref<32x32xf32, #tpu.memory_space<vmem>>, vector<32x32xf32>
    %cst = arith.constant dense<0.000000e+00> : vector<8x32xf32>
    %3 = tpu.matmul %0, %2, %cst {dimension_numbers = #tpu.dot_dimension_numbers<[1], [0], [0], [1], [0, 0, 1, 1], [], []>} : vector<8x32xf32>, vector<32x32xf32>, vector<8x32xf32> -> vector<8x32xf32>
    %c0_5 = arith.constant 0 : index
    %c0_6 = arith.constant 0 : index
    %4 = vector.load %arg3[%c0_5, %c0_6] : memref<1x32xf32, #tpu.memory_space<vmem>>, vector<1x32xf32>
    %5 = vector.broadcast %4 : vector<1x32xf32> to vector<8x32xf32>
    %6 = arith.addf %3, %5 : vector<8x32xf32>
    %c0_7 = arith.constant 0 : index
    %c0_8 = arith.constant 0 : index
    %7 = vector.load %arg4[%c0_7, %c0_8] : memref<32x64xf32, #tpu.memory_space<vmem>>, vector<32x64xf32>
    %cst_9 = arith.constant dense<0.000000e+00> : vector<8x64xf32>
    %8 = tpu.matmul %1, %7, %cst_9 {dimension_numbers = #tpu.dot_dimension_numbers<[1], [0], [0], [1], [0, 0, 1, 1], [], []>} : vector<8x32xf32>, vector<32x64xf32>, vector<8x64xf32> -> vector<8x64xf32>
    %9 = vector.extract_strided_slice %8 {offsets = [0, 0], sizes = [8, 32], strides = [1, 1]} : vector<8x64xf32> to vector<8x32xf32>
    %10 = vector.extract_strided_slice %8 {offsets = [0, 32], sizes = [8, 32], strides = [1, 1]} : vector<8x64xf32> to vector<8x32xf32>
    %cst_10 = arith.constant dense<0.000000e+00> : vector<8x8xf32>
    %11 = tpu.matmul %6, %9, %cst_10 {dimension_numbers = #tpu.dot_dimension_numbers<[1], [1], [0], [0], [0, 0, 1, 0], [], []>} : vector<8x32xf32>, vector<8x32xf32>, vector<8x8xf32> -> vector<8x8xf32>
    %cst_11 = arith.constant dense<0xFF800000> : vector<8xf32>
    %12 = vector.multi_reduction <maximumf>, %11, %cst_11 [1] : vector<8x8xf32> to vector<8xf32>
    %13 = vector.shape_cast %12 : vector<8xf32> to vector<8x1xf32>
    %14 = vector.broadcast %13 : vector<8x1xf32> to vector<8x8xf32>
    %15 = arith.subf %11, %14 : vector<8x8xf32>
    %16 = math.exp %15 : vector<8x8xf32>
    %cst_12 = arith.constant dense<0.000000e+00> : vector<8xf32>
    %17 = vector.multi_reduction <add>, %16, %cst_12 [1] : vector<8x8xf32> to vector<8xf32>
    %18 = vector.shape_cast %17 : vector<8xf32> to vector<8x1xf32>
    %19 = tpu.reciprocal %18 : vector<8x1xf32> -> vector<8x1xf32>
    %20 = vector.broadcast %19 : vector<8x1xf32> to vector<8x8xf32>
    %21 = arith.mulf %16, %20 : vector<8x8xf32>
    %cst_13 = arith.constant dense<0.000000e+00> : vector<8x32xf32>
    %22 = tpu.matmul %21, %10, %cst_13 {dimension_numbers = #tpu.dot_dimension_numbers<[1], [0], [0], [1], [0, 0, 1, 1], [], []>} : vector<8x8xf32>, vector<8x32xf32>, vector<8x32xf32> -> vector<8x32xf32>
    %c0_14 = arith.constant 0 : index
    %c0_15 = arith.constant 0 : index
    %23 = vector.load %arg5[%c0_14, %c0_15] : memref<1x32xf32, #tpu.memory_space<vmem>>, vector<1x32xf32>
    %24 = vector.broadcast %23 : vector<1x32xf32> to vector<8x32xf32>
    %25 = arith.addf %22, %24 : vector<8x32xf32>
    %26 = arith.mulf %0, %25 : vector<8x32xf32>
    %c0_16 = arith.constant 0 : index
    %c0_17 = arith.constant 0 : index
    %27 = vector.load %arg6[%c0_16, %c0_17] : memref<32x32xf32, #tpu.memory_space<vmem>>, vector<32x32xf32>
    %cst_18 = arith.constant dense<0.000000e+00> : vector<8x32xf32>
    %28 = tpu.matmul %26, %27, %cst_18 {dimension_numbers = #tpu.dot_dimension_numbers<[1], [0], [0], [1], [0, 0, 1, 1], [], []>} : vector<8x32xf32>, vector<32x32xf32>, vector<8x32xf32> -> vector<8x32xf32>
    %c0_19 = arith.constant 0 : index
    %c0_20 = arith.constant 0 : index
    %29 = vector.load %arg7[%c0_19, %c0_20] : memref<1x32xf32, #tpu.memory_space<vmem>>, vector<1x32xf32>
    %30 = vector.broadcast %29 : vector<1x32xf32> to vector<8x32xf32>
    %31 = arith.addf %28, %30 : vector<8x32xf32>
    %cst_21 = arith.constant 5.000000e-01 : f32
    %32 = vector.broadcast %cst_21 : f32 to vector<8x32xf32>
    %33 = arith.mulf %32, %31 : vector<8x32xf32>
    %cst_22 = arith.constant 0.707106769 : f32
    %34 = vector.broadcast %cst_22 : f32 to vector<8x32xf32>
    %35 = arith.mulf %31, %34 : vector<8x32xf32>
    %cst_23 = arith.constant 0.000000e+00 : f32
    %36 = vector.broadcast %cst_23 : f32 to vector<8x32xf32>
    %37 = arith.cmpf oge, %35, %36 : vector<8x32xf32>
    %cst_24 = arith.constant 1.000000e+00 : f32
    %cst_25 = arith.constant -1.000000e+00 : f32
    %38 = vector.broadcast %cst_24 : f32 to vector<8x32xf32>
    %39 = vector.broadcast %cst_25 : f32 to vector<8x32xf32>
    %40 = arith.select %37, %38, %39 : vector<8x32xi1>, vector<8x32xf32>
    %41 = math.absf %35 : vector<8x32xf32>
    %cst_26 = arith.constant 0.327591091 : f32
    %42 = vector.broadcast %cst_26 : f32 to vector<8x32xf32>
    %43 = arith.mulf %42, %41 : vector<8x32xf32>
    %cst_27 = arith.constant 1.000000e+00 : f32
    %44 = vector.broadcast %cst_27 : f32 to vector<8x32xf32>
    %45 = arith.addf %44, %43 : vector<8x32xf32>
    %46 = tpu.reciprocal %45 : vector<8x32xf32> -> vector<8x32xf32>
    %cst_28 = arith.constant 1.06140542 : f32
    %47 = vector.broadcast %cst_28 : f32 to vector<8x32xf32>
    %48 = arith.mulf %47, %46 : vector<8x32xf32>
    %cst_29 = arith.constant -1.45315206 : f32
    %49 = vector.broadcast %cst_29 : f32 to vector<8x32xf32>
    %50 = arith.addf %48, %49 : vector<8x32xf32>
    %51 = arith.mulf %50, %46 : vector<8x32xf32>
    %cst_30 = arith.constant 1.42141378 : f32
    %52 = vector.broadcast %cst_30 : f32 to vector<8x32xf32>
    %53 = arith.addf %51, %52 : vector<8x32xf32>
    %54 = arith.mulf %53, %46 : vector<8x32xf32>
    %cst_31 = arith.constant -0.284496725 : f32
    %55 = vector.broadcast %cst_31 : f32 to vector<8x32xf32>
    %56 = arith.addf %54, %55 : vector<8x32xf32>
    %57 = arith.mulf %56, %46 : vector<8x32xf32>
    %cst_32 = arith.constant 0.254829586 : f32
    %58 = vector.broadcast %cst_32 : f32 to vector<8x32xf32>
    %59 = arith.addf %57, %58 : vector<8x32xf32>
    %60 = arith.mulf %59, %46 : vector<8x32xf32>
    %cst_33 = arith.constant 0.000000e+00 : f32
    %61 = vector.broadcast %cst_33 : f32 to vector<8x32xf32>
    %62 = arith.subf %61, %41 : vector<8x32xf32>
    %63 = arith.mulf %62, %41 : vector<8x32xf32>
    %64 = math.exp %63 : vector<8x32xf32>
    %65 = arith.mulf %60, %64 : vector<8x32xf32>
    %cst_34 = arith.constant 1.000000e+00 : f32
    %66 = vector.broadcast %cst_34 : f32 to vector<8x32xf32>
    %67 = arith.subf %66, %65 : vector<8x32xf32>
    %68 = arith.mulf %40, %67 : vector<8x32xf32>
    %cst_35 = arith.constant 1.000000e+00 : f32
    %69 = vector.broadcast %cst_35 : f32 to vector<8x32xf32>
    %70 = arith.addf %69, %68 : vector<8x32xf32>
    %71 = arith.mulf %33, %70 : vector<8x32xf32>
    %c0_36 = arith.constant 0 : index
    %c0_37 = arith.constant 0 : index
    %72 = vector.load %arg8[%c0_36, %c0_37] : memref<32x2xf32, #tpu.memory_space<vmem>>, vector<32x2xf32>
    %cst_38 = arith.constant dense<0.000000e+00> : vector<8x2xf32>
    %73 = tpu.matmul %71, %72, %cst_38 {dimension_numbers = #tpu.dot_dimension_numbers<[1], [0], [0], [1], [0, 0, 1, 1], [], []>} : vector<8x32xf32>, vector<32x2xf32>, vector<8x2xf32> -> vector<8x2xf32>
    %c0_39 = arith.constant 0 : index
    %c0_40 = arith.constant 0 : index
    %74 = vector.load %arg9[%c0_39, %c0_40] : memref<1x2xf32, #tpu.memory_space<vmem>>, vector<1x2xf32>
    %75 = vector.broadcast %74 : vector<1x2xf32> to vector<8x2xf32>
    %76 = arith.addf %73, %75 : vector<8x2xf32>
    %c0_41 = arith.constant 0 : index
    %c0_42 = arith.constant 0 : index
    %77 = vector.load %arg11[%c0_41, %c0_42] : memref<8x2xf32, #tpu.memory_space<vmem>>, vector<8x2xf32>
    tpu.vector_store %arg11[%c0_41, %c0_42], %76 {strides = array<i32>} : memref<8x2xf32, #tpu.memory_space<vmem>>, vector<8x2xf32>,
    %78 = vector.extract_strided_slice %76 {offsets = [0, 1], sizes = [8, 1], strides = [1, 1]} : vector<8x2xf32> to vector<8x1xf32>
    %79 = vector.extract_strided_slice %76 {offsets = [0, 0], sizes = [8, 1], strides = [1, 1]} : vector<8x2xf32> to vector<8x1xf32>
    %80 = arith.cmpf ogt, %78, %79 : vector<8x1xf32>
    %81 = arith.extui %80 : vector<8x1xi1> to vector<8x1xi32>
    %c0_43 = arith.constant 0 : index
    %c0_44 = arith.constant 0 : index
    %82 = vector.load %arg10[%c0_43, %c0_44] : memref<8x1xi32, #tpu.memory_space<vmem>>, vector<8x1xi32>
    tpu.vector_store %arg10[%c0_43, %c0_44], %81 {strides = array<i32>} : memref<8x1xi32, #tpu.memory_space<vmem>>, vector<8x1xi32>,
    return
  }
}

</mosaic_0001>

<llo_original>
// kernel: tpu_custom_call.1
$region0: #{tpu_custom_call.1}
  #allocation0 [shape = 'u32[]', space=smem, size = 0x4, offset = 0x4, fixed_abs, tag = 'smem constant byte address 0x4 - core index']
  #allocation1 [shape = 'u32[72,128]{1,0:T(1,128)}', space=vmem, size = 0x9000, scoped, tag = 'internal scratch']
  %s0 = inlined_call_operand.hbm [shape: f32[8,32], index: 0, kind: input, shape index: {}]
  %s1 = inlined_call_operand.hbm [shape: f32[8,32], index: 1, kind: input, shape index: {}]
  %s2 = inlined_call_operand.vmem [shape: f32[32,32], index: 2, kind: input, shape index: {}]
  %s3 = inlined_call_operand.vmem [shape: f32[1,32], index: 3, kind: input, shape index: {}]
  %s4 = inlined_call_operand.hbm [shape: f32[32,64], index: 4, kind: input, shape index: {}]
  %s5 = inlined_call_operand.vmem [shape: f32[1,32], index: 5, kind: input, shape index: {}]
  %s6 = inlined_call_operand.hbm [shape: f32[32,32], index: 6, kind: input, shape index: {}]
  %s7 = inlined_call_operand.vmem [shape: f32[1,32], index: 7, kind: input, shape index: {}]
  %s8 = inlined_call_operand.vmem [shape: f32[32,2], index: 8, kind: input, shape index: {}]
  %s9 = inlined_call_operand.vmem [shape: f32[1,2], index: 9, kind: input, shape index: {}]
  %s10 = inlined_call_operand.vmem [shape: s32[8,1], index: 10, kind: output, shape index: {0}]
  %s11 = inlined_call_operand.vmem [shape: f32[8,2], index: 11, kind: output, shape index: {1}]
  %12 = xla_tuple %s10, %s11
  %s13 = sld [smem:[#allocation0]]
  $region74: #{tpu_custom_call.1} parent=0
    _
  %s15 = ssub.s32 1, %s13
  %s16 = scalar_select 0, %s15, %s13
  $region1: #{tpu_custom_call.1} parent=0
    #allocation2 [shape = 'u8[4096]{0}', space=vmem, size = 0x1000, scoped, tag = 'input window, operand 0, single buffered']
    #allocation3 [shape = 's32[1]{0}', space=sflag, size = 0x4, scoped, tag = 'scoped memory for tpu_custom_call.1']
    #allocation4 [shape = 'u8[4096]{0}', space=vmem, size = 0x1000, scoped, tag = 'input window, operand 1, single buffered']
    #allocation5 [shape = 's32[1]{0}', space=sflag, size = 0x4, scoped, tag = 'scoped memory for tpu_custom_call.1']
    #allocation6 [shape = 'u8[16384]{0}', space=vmem, size = 0x4000, scoped, tag = 'input window, operand 4, single buffered']
    #allocation7 [shape = 'u8[16384]{0}', space=vmem, size = 0x4000, scoped, tag = 'input window, operand 6, single buffered']
    #allocation8 [shape = 's32[1]{0}', space=sflag, size = 0x4, scoped, tag = 'scoped memory for tpu_custom_call.1']
    %17 = vsyncpa [#allocation3], 0
    %18 = vsyncpa [#allocation5], 0
    %19 = vsyncpa [#allocation8], 0
    // Predicated region
    $region2: #{tpu_custom_call.1} parent=1 // pred_check
      _
    $region3: #{tpu_custom_call.1} parent=1 // pred_check_branch
      %21 = sbr.rel (0) target = $region5
    $region4: #{tpu_custom_call.1} parent=1 // pred_region
      %23 = vsyncadd [#allocation3], 0
      %s25 = sshll.u32 %s0, 4
      %s26 = int_to_ptr.hbm [resolvable:$true] %s25
      %s27 = sshll.u32 [#allocation2], 4
      %s28 = int_to_ptr.vmem [resolvable:$true] %s27
      %30 = dma.hbm_to_vmem [thread:$0]  %s26, 128, %s28, [#allocation3]
    $region5: #{tpu_custom_call.1} parent=1 // pred_fallthru
      _
    // Predicated region
    $region6: #{tpu_custom_call.1} parent=1 // pred_check
      _
    $region7: #{tpu_custom_call.1} parent=1 // pred_check_branch
      %32 = sbr.rel (0) target = $region9
    $region8: #{tpu_custom_call.1} parent=1 // pred_region
      %34 = vsyncadd [#allocation5], 0
      %s36 = sshll.u32 %s1, 4
      %s37 = int_to_ptr.hbm [resolvable:$true] %s36
      %s38 = sshll.u32 [#allocation4], 4
      %s39 = int_to_ptr.vmem [resolvable:$true] %s38
      %41 = dma.hbm_to_vmem [thread:$0]  %s37, 128, %s39, [#allocation5]
    $region9: #{tpu_custom_call.1} parent=1 // pred_fallthru
      _
    // Predicated region
    $region10: #{tpu_custom_call.1} parent=1 // pred_check
      _
    $region11: #{tpu_custom_call.1} parent=1 // pred_check_branch
      %43 = sbr.rel (0) target = $region13
    $region12: #{tpu_custom_call.1} parent=1 // pred_region
      _
    $region13: #{tpu_custom_call.1} parent=1 // pred_fallthru
      _
    // Predicated region
    $region14: #{tpu_custom_call.1} parent=1 // pred_check
      _
    $region15: #{tpu_custom_call.1} parent=1 // pred_check_branch
      %45 = sbr.rel (0) target = $region17
    $region16: #{tpu_custom_call.1} parent=1 // pred_region
      _
    $region17: #{tpu_custom_call.1} parent=1 // pred_fallthru
      _
    // Predicated region
    $region18: #{tpu_custom_call.1} parent=1 // pred_check
      _
    $region19: #{tpu_custom_call.1} parent=1 // pred_check_branch
      %47 = sbr.rel (0) target = $region21
    $region20: #{tpu_custom_call.1} parent=1 // pred_region
      %49 = vsyncadd [#allocation5], 0
      %s50 = sshll.u32 %s4, 4
      %s51 = int_to_ptr.hbm [resolvable:$true] %s50
      %s52 = sshll.u32 [#allocation6], 4
      %s53 = int_to_ptr.vmem [resolvable:$true] %s52
      %58 = dma.hbm_to_vmem [thread:$0]  %s51, 512, %s53, [#allocation5], 128, 128, 8
    $region21: #{tpu_custom_call.1} parent=1 // pred_fallthru
      _
    // Predicated region
    $region22: #{tpu_custom_call.1} parent=1 // pred_check
      _
    $region23: #{tpu_custom_call.1} parent=1 // pred_check_branch
      %60 = sbr.rel (0) target = $region25
    $region24: #{tpu_custom_call.1} parent=1 // pred_region
      _
    $region25: #{tpu_custom_call.1} parent=1 // pred_fallthru
      _
    // Predicated region
    $region26: #{tpu_custom_call.1} parent=1 // pred_check
      _
    $region27: #{tpu_custom_call.1} parent=1 // pred_check_branch
      %62 = sbr.rel (0) target = $region29
    $region28: #{tpu_custom_call.1} parent=1 // pred_region
      %64 = vsyncadd [#allocation8], 0
      %s65 = sshll.u32 %s6, 4
      %s66 = int_to_ptr.hbm [resolvable:$true] %s65
      %s67 = sshll.u32 [#allocation7], 4
      %s68 = int_to_ptr.vmem [resolvable:$true] %s67
      %73 = dma.hbm_to_vmem [thread:$0]  %s66, 512, %s68, [#allocation8], 128, 128, 8
    $region29: #{tpu_custom_call.1} parent=1 // pred_fallthru
      _
    // Predicated region
    $region30: #{tpu_custom_call.1} parent=1 // pred_check
      _
    $region31: #{tpu_custom_call.1} parent=1 // pred_check_branch
      %75 = sbr.rel (0) target = $region33
    $region32: #{tpu_custom_call.1} parent=1 // pred_region
      _
    $region33: #{tpu_custom_call.1} parent=1 // pred_fallthru
      _
    // Predicated region
    $region34: #{tpu_custom_call.1} parent=1 // pred_check
      _
    $region35: #{tpu_custom_call.1} parent=1 // pred_check_branch
      %77 = sbr.rel (0) target = $region37
    $region36: #{tpu_custom_call.1} parent=1 // pred_region
      _
    $region37: #{tpu_custom_call.1} parent=1 // pred_fallthru
      _
    // Predicated region
    $region38: #{tpu_custom_call.1} parent=1 // pred_check
      _
    $region39: #{tpu_custom_call.1} parent=1 // pred_check_branch
      %79 = sbr.rel (0) target = $region41
    $region40: #{tpu_custom_call.1} parent=1 // pred_region
      _
    $region41: #{tpu_custom_call.1} parent=1 // pred_fallthru
      _
    // Predicated region
    $region42: #{tpu_custom_call.1} parent=1 // pred_check
      _
    $region43: #{tpu_custom_call.1} parent=1 // pred_check_branch
      %81 = sbr.rel (0) target = $region45
    $region44: #{tpu_custom_call.1} parent=1 // pred_region
      %83 = dma.done [#allocation3], 128
    $region45: #{tpu_custom_call.1} parent=1 // pred_fallthru
      _
    // Predicated region
    $region46: #{tpu_custom_call.1} parent=1 // pred_check
      _
    $region47: #{tpu_custom_call.1} parent=1 // pred_check_branch
      %85 = sbr.rel (0) target = $region49
    $region48: #{tpu_custom_call.1} parent=1 // pred_region
      %87 = dma.done [#allocation5], 128
    $region49: #{tpu_custom_call.1} parent=1 // pred_fallthru
      _
    // Predicated region
    $region50: #{tpu_custom_call.1} parent=1 // pred_check
      _
    $region51: #{tpu_custom_call.1} parent=1 // pred_check_branch
      %89 = sbr.rel (0) target = $region53
    $region52: #{tpu_custom_call.1} parent=1 // pred_region
      %91 = dma.done [#allocation5], 512
    $region53: #{tpu_custom_call.1} parent=1 // pred_fallthru
      _
    // Predicated region
    $region54: #{tpu_custom_call.1} parent=1 // pred_check
      _
    $region55: #{tpu_custom_call.1} parent=1 // pred_check_branch
      %93 = sbr.rel (0) target = $region57
    $region56: #{tpu_custom_call.1} parent=1 // pred_region
      %95 = dma.done [#allocation8], 512
    $region57: #{tpu_custom_call.1} parent=1 // pred_fallthru
      _
    %v96 = vld [vmem:[#allocation2] sm:$0xff]
    %v97 = vld [vmem:[#allocation4] sm:$0xff]
    %v98 = vld [vmem:[%s2] sm:$0xff]
    %v99 = vld [vmem:[%s2 + $0x8] sm:$0xff]
    %v100 = vld [vmem:[%s2 + $0x10] sm:$0xff]
    %v101 = vld [vmem:[%s2 + $0x18] sm:$0xff]
    %v102 = vld [vmem:[%s3] sm:$0x1]
    %v104 = vperm.slane %v102, 0
    %vm106 = vcmask 261120
    %v108 = vsel %vm106, %v96, 0
    %110 = vmatpush.msra.mxu0 0.0
    %111 = vmatpush.msra.mxu0 0.0
    %112 = vmatpush.msra.mxu0 0.0
    %113 = vmatpush.msra.mxu0 0.0
    %114 = vmatpush.msra.mxu0 0.0
    %115 = vmatpush.msra.mxu0 0.0
    %116 = vmatpush.msra.mxu0 0.0
    %117 = vmatpush.msra.mxu0 0.0
    %118 = vmatpush.msra.mxu0 0.0
    %119 = vmatpush.msra.mxu0 0.0
    %120 = vmatpush.msra.mxu0 0.0
    %121 = vmatpush.msra.mxu0 0.0
    %122 = vmatpush.msra.mxu0 %v101
    %123 = vmatpush.msra.mxu0 %v100
    %124 = vmatpush.msra.mxu0 %v99
    %125 = vmatpush.msra.mxu0 %v98
    %126 = vmatmul.f32.gmra.mxu0 %v108
    %v127 = vpop.f32.mrf.mxu0
    %v128 = vadd.f32 %v104, %v127
    %129 = vdwg.mxu0
    %v130 = vld [vmem:[#allocation6] sm:$0xff]
    %v131 = vld [vmem:[#allocation6 + $0x8] sm:$0xff]
    %v132 = vld [vmem:[#allocation6 + $0x10] sm:$0xff]
    %v133 = vld [vmem:[#allocation6 + $0x18] sm:$0xff]
    %v135 = vsel %vm106, %v97, 0
    %137 = vmatpush.msra.mxu0 0.0
    %138 = vmatpush.msra.mxu0 0.0
    %139 = vmatpush.msra.mxu0 0.0
    %140 = vmatpush.msra.mxu0 0.0
    %141 = vmatpush.msra.mxu0 0.0
    %142 = vmatpush.msra.mxu0 0.0
    %143 = vmatpush.msra.mxu0 0.0
    %144 = vmatpush.msra.mxu0 0.0
    %145 = vmatpush.msra.mxu0 0.0
    %146 = vmatpush.msra.mxu0 0.0
    %147 = vmatpush.msra.mxu0 0.0
    %148 = vmatpush.msra.mxu0 0.0
    %149 = vmatpush.msra.mxu0 %v133
    %150 = vmatpush.msra.mxu0 %v132
    %151 = vmatpush.msra.mxu0 %v131
    %152 = vmatpush.msra.mxu0 %v130
    %153 = vmatmul.f32.gmra.mxu0 %v135
    %v154 = vpop.f32.mrf.mxu0
    %v155 = vadd.f32 0.0, %v154
    %156 = vdwg.mxu0
    %v158 = vsel %vm106, %v128, 0
    %v161 = vsel %vm106, %v155, 0
    %163 = vmatpush.xpose.msra.mxu0 0.0
    %164 = vmatpush.xpose.msra.mxu0 0.0
    %165 = vmatpush.xpose.msra.mxu0 0.0
    %166 = vmatpush.xpose.msra.mxu0 0.0
    %167 = vmatpush.xpose.msra.mxu0 0.0
    %168 = vmatpush.xpose.msra.mxu0 0.0
    %169 = vmatpush.xpose.msra.mxu0 0.0
    %170 = vmatpush.xpose.msra.mxu0 0.0
    %171 = vmatpush.xpose.msra.mxu0 0.0
    %172 = vmatpush.xpose.msra.mxu0 0.0
    %173 = vmatpush.xpose.msra.mxu0 0.0
    %174 = vmatpush.xpose.msra.mxu0 0.0
    %175 = vmatpush.xpose.msra.mxu0 0.0
    %176 = vmatpush.xpose.msra.mxu0 0.0
    %177 = vmatpush.xpose.msra.mxu0 0.0
    %178 = vmatpush.xpose.msra.mxu0 %v161
    %179 = vmatmul.f32.gmra.mxu0 %v158
    %v180 = vpop.f32.mrf.mxu0
    %v181 = vadd.f32 0.0, %v180
    %182 = vdwg.mxu0
    %vm183 = vcmask 64512
    %v184 = vsel %vm183, %v181, -inf
    %185 = vmax.xlane.f32.xlu0 %v184
    %v186 = vpop.xlane.xlu0 %185
    %v187 = vsub.f32 %v181, %v186
    %v188 = vmul.f32 %v187, 1.442695
    %v189 = vpow.pop %v188
    %v190 = vsel %vm183, %v189, 0.0
    %191 = vadd.xlane.f32.xlu0 %v190
    %v192 = vpop.xlane.xlu0 %191
    %v193 = vrcp.pop %v192
    %v194 = vmul.f32 %v192, %v193
    %v195 = vsub.f32 1.0, %v194
    %v196 = vmul.f32 %v193, %v195
    %v197 = vadd.f32 %v193, %v196
    %vm198 = vweird.f32 %v192
    %vm199 = vweird.f32 %v193
    %vm200 = vmor %vm198, %vm199
    %v201 = vsel %vm200, %v193, %v197
    %v202 = vand.u32 2147483647, %v192
    %vm203 = vcmp.eq.f32.partialorder %v202, 8.507059e+37
    %v204 = vand.u32 %v192, 2147483648
    %v205 = vor.u32 1.1754944e-38, %v204
    %v206 = vsel %vm203, %v205, %v201
    %v207 = vmul.f32 %v189, %v206
    %v208 = vld [vmem:[%s5] sm:$0x1]
    %v210 = vperm.slane %v208, 0
    %212 = vrot.lane.b32.xlu0 %v155, 96
    %v213 = vpop.permute.xlu0 %212
    %v216 = vsel %vm183, %v207, 0
    %218 = vmatpush.msra.mxu0 0.0
    %219 = vmatpush.msra.mxu0 0.0
    %220 = vmatpush.msra.mxu0 0.0
    %221 = vmatpush.msra.mxu0 0.0
    %222 = vmatpush.msra.mxu0 0.0
    %223 = vmatpush.msra.mxu0 0.0
    %224 = vmatpush.msra.mxu0 0.0
    %225 = vmatpush.msra.mxu0 0.0
    %226 = vmatpush.msra.mxu0 0.0
    %227 = vmatpush.msra.mxu0 0.0
    %228 = vmatpush.msra.mxu0 0.0
    %229 = vmatpush.msra.mxu0 0.0
    %230 = vmatpush.msra.mxu0 0.0
    %231 = vmatpush.msra.mxu0 0.0
    %232 = vmatpush.msra.mxu0 0.0
    %233 = vmatpush.msra.mxu0 %v213
    %234 = vmatmul.f32.gmra.mxu0 %v216
    %v235 = vpop.f32.mrf.mxu0
    %v236 = vadd.f32 %v210, %v235
    %237 = vdwg.mxu0
    %v238 = vmul.f32 %v96, %v236
    %v239 = vld [vmem:[#allocation7] sm:$0xff]
    %v240 = vld [vmem:[#allocation7 + $0x8] sm:$0xff]
    %v241 = vld [vmem:[#allocation7 + $0x10] sm:$0xff]
    %v242 = vld [vmem:[#allocation7 + $0x18] sm:$0xff]
    %v243 = vld [vmem:[%s7] sm:$0x1]
    %v245 = vperm.slane %v243, 0
    %v248 = vsel %vm106, %v238, 0
    %250 = vmatpush.msra.mxu0 0.0
    %251 = vmatpush.msra.mxu0 0.0
    %252 = vmatpush.msra.mxu0 0.0
    %253 = vmatpush.msra.mxu0 0.0
    %254 = vmatpush.msra.mxu0 0.0
    %255 = vmatpush.msra.mxu0 0.0
    %256 = vmatpush.msra.mxu0 0.0
    %257 = vmatpush.msra.mxu0 0.0
    %258 = vmatpush.msra.mxu0 0.0
    %259 = vmatpush.msra.mxu0 0.0
    %260 = vmatpush.msra.mxu0 0.0
    %261 = vmatpush.msra.mxu0 0.0
    %262 = vmatpush.msra.mxu0 %v242
    %263 = vmatpush.msra.mxu0 %v241
    %264 = vmatpush.msra.mxu0 %v240
    %265 = vmatpush.msra.mxu0 %v239
    %266 = vmatmul.f32.gmra.mxu0 %v248
    %v267 = vpop.f32.mrf.mxu0
    %v268 = vadd.f32 %v245, %v267
    %269 = vdwg.mxu0
    %v270 = vmul.f32 %v268, 0.5
    %v271 = vmul.f32 %v268, 0.70710677
    %vm272 = vcmp.ge.f32.partialorder %v271, 0.0
    %v273 = vsel %vm272, 1.0, -1.0
    %v274 = vand.u32 2147483647, %v271
    %v275 = vmul.f32 %v274, 0.3275911
    %v276 = vadd.f32 %v275, 1.0
    %v277 = vrcp.pop %v276
    %v278 = vmul.f32 %v276, %v277
    %v279 = vsub.f32 1.0, %v278
    %v280 = vmul.f32 %v277, %v279
    %v281 = vadd.f32 %v277, %v280
    %vm282 = vweird.f32 %v276
    %vm283 = vweird.f32 %v277
    %vm284 = vmor %vm282, %vm283
    %v285 = vsel %vm284, %v277, %v281
    %v286 = vand.u32 2147483647, %v276
    %vm287 = vcmp.eq.f32.partialorder %v286, 8.507059e+37
    %v288 = vand.u32 %v276, 2147483648
    %v289 = vor.u32 1.1754944e-38, %v288
    %v290 = vsel %vm287, %v289, %v285
    %v291 = vmul.f32 %v290, 1.0614054
    %v292 = vadd.f32 %v291, -1.4531521
    %v293 = vmul.f32 %v292, %v290
    %v294 = vadd.f32 %v293, 1.4214138
    %v295 = vmul.f32 %v294, %v290
    %v296 = vadd.f32 %v295, -0.28449672
    %v297 = vmul.f32 %v296, %v290
    %v298 = vadd.f32 %v297, 0.2548296
    %v299 = vmul.f32 %v298, %v290
    %v300 = vsub.f32 0.0, %v274
    %v301 = vmul.f32 %v300, %v274
    %v302 = vmul.f32 %v301, 1.442695
    %v303 = vpow.pop %v302
    %v304 = vmul.f32 %v299, %v303
    %v305 = vsub.f32 1.0, %v304
    %v306 = vmul.f32 %v273, %v305
    %v307 = vadd.f32 %v306, 1.0
    %v308 = vmul.f32 %v270, %v307
    %v309 = vld [vmem:[%s8] sm:$0xff]
    %v310 = vld [vmem:[%s8 + $0x8] sm:$0xff]
    %v311 = vld [vmem:[%s8 + $0x10] sm:$0xff]
    %v312 = vld [vmem:[%s8 + $0x18] sm:$0xff]
    %v313 = vld [vmem:[%s9] sm:$0x1]
    %v315 = vperm.slane %v313, 0
    %v318 = vsel %vm106, %v308, 0
    %320 = vmatpush.msra.mxu0 0.0
    %321 = vmatpush.msra.mxu0 0.0
    %322 = vmatpush.msra.mxu0 0.0
    %323 = vmatpush.msra.mxu0 0.0
    %324 = vmatpush.msra.mxu0 0.0
    %325 = vmatpush.msra.mxu0 0.0
    %326 = vmatpush.msra.mxu0 0.0
    %327 = vmatpush.msra.mxu0 0.0
    %328 = vmatpush.msra.mxu0 0.0
    %329 = vmatpush.msra.mxu0 0.0
    %330 = vmatpush.msra.mxu0 0.0
    %331 = vmatpush.msra.mxu0 0.0
    %332 = vmatpush.msra.mxu0 %v312
    %333 = vmatpush.msra.mxu0 %v311
    %334 = vmatpush.msra.mxu0 %v310
    %335 = vmatpush.msra.mxu0 %v309
    %336 = vmatmul.f32.gmra.mxu0 %v318
    %v337 = vpop.f32.mrf.mxu0
    %v338 = vadd.f32 %v315, %v337
    %339 = vdwg.mxu0
    %vm340 = vcmask 15360
    %341 = vst.msk [vmem:[%s11] sm:$0xff] %vm340, %v338
    %343 = vrot.lane.b32.xlu0 %v338, 1
    %v344 = vpop.permute.xlu0 %343
    %vm346 = vcmp.gt.f32.partialorder %v338, %v344
    %v347 = vsel %vm346, 1, 0
    %348 = vrot.lane.b32.xlu0 %v347, 127
    %v349 = vpop.permute.xlu0 %348
    %vm350 = vcmask 7168
    %351 = vst.msk [vmem:[%s10] sm:$0xff] %vm350, %v349
    // Predicated region
    $region58: #{tpu_custom_call.1} parent=1 // pred_check
      _
    $region59: #{tpu_custom_call.1} parent=1 // pred_check_branch
      %353 = sbr.rel (0) target = $region61
    $region60: #{tpu_custom_call.1} parent=1 // pred_region
      _
    $region61: #{tpu_custom_call.1} parent=1 // pred_fallthru
      _
    // Predicated region
    $region62: #{tpu_custom_call.1} parent=1 // pred_check
      _
    $region63: #{tpu_custom_call.1} parent=1 // pred_check_branch
      %355 = sbr.rel (0) target = $region65
    $region64: #{tpu_custom_call.1} parent=1 // pred_region
      _
    $region65: #{tpu_custom_call.1} parent=1 // pred_fallthru
      _
    // Predicated region
    $region66: #{tpu_custom_call.1} parent=1 // pred_check
      _
    $region67: #{tpu_custom_call.1} parent=1 // pred_check_branch
      %357 = sbr.rel (0) target = $region69
    $region68: #{tpu_custom_call.1} parent=1 // pred_region
      _
    $region69: #{tpu_custom_call.1} parent=1 // pred_fallthru
      _
    // Predicated region
    $region70: #{tpu_custom_call.1} parent=1 // pred_check
      _
    $region71: #{tpu_custom_call.1} parent=1 // pred_check_branch
      %359 = sbr.rel (0) target = $region73
    $region72: #{tpu_custom_call.1} parent=1 // pred_region
      _
    $region73: #{tpu_custom_call.1} parent=1 // pred_fallthru
      _
    %360 = vsyncpa [#allocation3], 1
    %361 = vsyncpa [#allocation5], 1
    %362 = vsyncpa [#allocation8], 1

</llo_original>
